<compile_context>
chip_gen: v6e
topology: v6e:2x2x1
jax: 0.10.0
libtpu: 0.0.40
codegen_flags: <defaults>
</compile_context>

<pallas_src>
import functools

import jax
import jax.numpy as jnp
from jax.experimental import pallas as pl
from jax.experimental.pallas import tpu as pltpu


def actionnet_kernel(p_ref, x_ref, noise_ref, out_ref, *, S, H1, H2, A):
    """p_ref: flat SMEM f32 params  [W1(H1,S), b1(H1), W2(H2,H1), b2(H2), W3(A,H2), b3(A)]
    x_ref: (S, TB) states^T tile; noise_ref/out_ref: (A, TB) — batch on lanes."""

    def layer(rows_in, n_in, n_out, base, relu):
        # rows_in: list of (1, TB) f32 vectors (one per input feature).
        w_off = base
        b_off = base + n_out * n_in
        out_rows = []
        for o in range(n_out):                      # fully unrolled: tiny dims
            acc = rows_in[0] * p_ref[w_off + o * n_in]
            for i in range(1, n_in):
                acc = acc + rows_in[i] * p_ref[w_off + o * n_in + i]
            acc = acc + p_ref[b_off + o]
            if relu:
                acc = jnp.maximum(acc, 0.0)
            out_rows.append(acc)
        return out_rows, b_off + n_out

    x_rows = [x_ref[i:i + 1, :] for i in range(S)]  # each (1, TB)
    h1, off = layer(x_rows, S, H1, 0, relu=True)
    h2, off = layer(h1, H1, H2, off, relu=True)
    a, _ = layer(h2, H2, A, off, relu=False)

    act = jnp.concatenate(a, axis=0)                # (A, TB), lane-dense
    out_ref[...] = jnp.tanh(act + noise_ref[...])


def _pick_tile_b(B):
    """Largest lane-dense (multiple-of-128) batch tile; prefer >= 2 grid steps
    so the parallel axis can span both v7x TensorCores."""
    candidates = (4096, 2048, 1024, 512, 256, 128)
    for t in candidates:
        if B % t == 0 and B // t >= 2:
            return t
    for t in candidates:
        if B % t == 0:
            return t
    return B  # small / non-128-multiple batch: single whole-batch tile


def actionnet_forward(states, params, noise, *, tile_b=None):
    """states: (B, state_size) f32; noise: (B, action_size) f32 (already /N)."""
    w1, b1, w2, b2, w3, b3 = params
    B, S = states.shape
    H1 = w1.shape[1]
    H2 = w2.shape[1]
    A = w3.shape[1]

    if tile_b is None:
        tile_b = _pick_tile_b(B)
    assert B % tile_b == 0, "batch must be divisible by tile_b"

    # Pack all weights (PyTorch (out, in) orientation) + biases into one flat
    # f32 array that lives in SMEM; the kernel reads them as broadcast scalars.
    flat_params = jnp.concatenate([
        w1.T.reshape(-1), b1.reshape(-1),
        w2.T.reshape(-1), b2.reshape(-1),
        w3.T.reshape(-1), b3.reshape(-1),
    ]).astype(jnp.float32)

    x_t = states.astype(jnp.float32).T   # (S, B)  — batch on lanes
    n_t = noise.astype(jnp.float32).T    # (A, B)

    kernel = functools.partial(actionnet_kernel, S=S, H1=H1, H2=H2, A=A)

    out_t = pl.pallas_call(
        kernel,
        out_shape=jax.ShapeDtypeStruct((A, B), jnp.float32),
        grid_spec=pltpu.PrefetchScalarGridSpec(
            num_scalar_prefetch=0,
            grid=(B // tile_b,),
            in_specs=[
                pl.BlockSpec(memory_space=pltpu.MemorySpace.SMEM),   # packed W/b
                pl.BlockSpec((S, tile_b), lambda i: (0, i)),         # states^T tile
                pl.BlockSpec((A, tile_b), lambda i: (0, i)),         # noise^T tile
            ],
            out_specs=pl.BlockSpec((A, tile_b), lambda i: (0, i)),
        ),
        compiler_params=pltpu.CompilerParams(
            dimension_semantics=("parallel",)),
    )(flat_params, x_t, n_t)

    return out_t.T                        # back to (B, A) for the caller


def init_params(key, state_size=4, action_size=2):
    """Deterministic PyTorch-style (Kaiming-uniform-ish) init for the 3 Linears."""
    dims = [(state_size, 4), (4, 8), (8, action_size)]
    params = []
    for fan_in, fan_out in dims:
        key, kw, kb = jax.random.split(key, 3)
        bound = 1.0 / jnp.sqrt(fan_in)
        w = jax.random.uniform(kw, (fan_in, fan_out), jnp.float32, -bound, bound)
        b = jax.random.uniform(kb, (1, fan_out), jnp.float32, -bound, bound)
        params += [w, b]
    return tuple(params)


if __name__ == "__main__":
    state_size = 4
    action_size = 2
    N = 128  # noise scale from the module (self.N)

    key = jax.random.PRNGKey(0)
    kp = jax.random.fold_in(key, 0)
    params = init_params(kp, state_size, action_size)
    w1, b1, w2, b2, w3, b3 = params

    # batch=256 exercises the lane-dense tiled path (tile_b=128, grid=(2,));
    # batch=16 exercises the small whole-batch fallback tile.
    for batch in (256, 16):
        kb = jax.random.fold_in(key, batch)
        ks, kn = jax.random.split(kb)
        states = jax.random.normal(ks, (batch, state_size), jnp.float32)
        noise = jax.random.normal(kn, (batch, action_size), jnp.float32) / N

        out = jax.block_until_ready(actionnet_forward(states, params, noise))

        # Pure-JAX reference of the same semantics.
        h1 = jnp.maximum(states @ w1 + b1, 0.0)
        h2 = jnp.maximum(h1 @ w2 + b2, 0.0)
        ref = jnp.tanh(h2 @ w3 + b3 + noise)
        assert out.shape == (batch, action_size)
        assert jnp.allclose(out, ref, atol=1e-5), f"mismatch vs reference (batch={batch})"

    print("KERNEL_OK")
</pallas_src>

<mosaic_0001>
module attributes {stable_mosaic.version = 11 : i64} {
  func.func @actionnet_kernel(%arg0: i32, %arg1: memref<78xf32, #tpu.memory_space<smem>>, %arg2: memref<4x128xf32, #tpu.memory_space<vmem>>, %arg3: memref<2x128xf32, #tpu.memory_space<vmem>>, %arg4: memref<2x128xf32, #tpu.memory_space<vmem>>) attributes {dimension_semantics = [#tpu.dimension_semantics<parallel>], iteration_bounds = array<i64: 2>, scalar_prefetch = 0 : i64, scratch_operands = 0 : i64, tpu.core_type = #tpu.core_type<tc>, window_params = [{transform_indices = @transform_0, window_bounds = array<i64: 78>}, {transform_indices = @transform_1, window_bounds = array<i64: 4, 128>}, {transform_indices = @transform_2, window_bounds = array<i64: 2, 128>}, {transform_indices = @transform_3, window_bounds = array<i64: 2, 128>}]} {
    %c0 = arith.constant 0 : index
    %c0_0 = arith.constant 0 : index
    %0 = vector.load %arg2[%c0, %c0_0] : memref<4x128xf32, #tpu.memory_space<vmem>>, vector<1x128xf32>
    %c1 = arith.constant 1 : index
    %c0_1 = arith.constant 0 : index
    %1 = vector.load %arg2[%c1, %c0_1] : memref<4x128xf32, #tpu.memory_space<vmem>>, vector<1x128xf32>
    %c2 = arith.constant 2 : index
    %c0_2 = arith.constant 0 : index
    %2 = vector.load %arg2[%c2, %c0_2] : memref<4x128xf32, #tpu.memory_space<vmem>>, vector<1x128xf32>
    %c3 = arith.constant 3 : index
    %c0_3 = arith.constant 0 : index
    %3 = vector.load %arg2[%c3, %c0_3] : memref<4x128xf32, #tpu.memory_space<vmem>>, vector<1x128xf32>
    %c0_4 = arith.constant 0 : index
    %4 = memref.load %arg1[%c0_4] : memref<78xf32, #tpu.memory_space<smem>>
    %5 = vector.broadcast %4 : f32 to vector<1x128xf32>
    %6 = arith.mulf %0, %5 : vector<1x128xf32>
    %c1_5 = arith.constant 1 : index
    %7 = memref.load %arg1[%c1_5] : memref<78xf32, #tpu.memory_space<smem>>
    %8 = vector.broadcast %7 : f32 to vector<1x128xf32>
    %9 = arith.mulf %1, %8 : vector<1x128xf32>
    %10 = arith.addf %6, %9 : vector<1x128xf32>
    %c2_6 = arith.constant 2 : index
    %11 = memref.load %arg1[%c2_6] : memref<78xf32, #tpu.memory_space<smem>>
    %12 = vector.broadcast %11 : f32 to vector<1x128xf32>
    %13 = arith.mulf %2, %12 : vector<1x128xf32>
    %14 = arith.addf %10, %13 : vector<1x128xf32>
    %c3_7 = arith.constant 3 : index
    %15 = memref.load %arg1[%c3_7] : memref<78xf32, #tpu.memory_space<smem>>
    %16 = vector.broadcast %15 : f32 to vector<1x128xf32>
    %17 = arith.mulf %3, %16 : vector<1x128xf32>
    %18 = arith.addf %14, %17 : vector<1x128xf32>
    %c16 = arith.constant 16 : index
    %19 = memref.load %arg1[%c16] : memref<78xf32, #tpu.memory_space<smem>>
    %20 = vector.broadcast %19 : f32 to vector<1x128xf32>
    %21 = arith.addf %18, %20 : vector<1x128xf32>
    %cst = arith.constant 0.000000e+00 : f32
    %22 = vector.broadcast %cst : f32 to vector<1x128xf32>
    %23 = arith.maximumf %21, %22 : vector<1x128xf32>
    %c4 = arith.constant 4 : index
    %24 = memref.load %arg1[%c4] : memref<78xf32, #tpu.memory_space<smem>>
    %25 = vector.broadcast %24 : f32 to vector<1x128xf32>
    %26 = arith.mulf %0, %25 : vector<1x128xf32>
    %c5 = arith.constant 5 : index
    %27 = memref.load %arg1[%c5] : memref<78xf32, #tpu.memory_space<smem>>
    %28 = vector.broadcast %27 : f32 to vector<1x128xf32>
    %29 = arith.mulf %1, %28 : vector<1x128xf32>
    %30 = arith.addf %26, %29 : vector<1x128xf32>
    %c6 = arith.constant 6 : index
    %31 = memref.load %arg1[%c6] : memref<78xf32, #tpu.memory_space<smem>>
    %32 = vector.broadcast %31 : f32 to vector<1x128xf32>
    %33 = arith.mulf %2, %32 : vector<1x128xf32>
    %34 = arith.addf %30, %33 : vector<1x128xf32>
    %c7 = arith.constant 7 : index
    %35 = memref.load %arg1[%c7] : memref<78xf32, #tpu.memory_space<smem>>
    %36 = vector.broadcast %35 : f32 to vector<1x128xf32>
    %37 = arith.mulf %3, %36 : vector<1x128xf32>
    %38 = arith.addf %34, %37 : vector<1x128xf32>
    %c17 = arith.constant 17 : index
    %39 = memref.load %arg1[%c17] : memref<78xf32, #tpu.memory_space<smem>>
    %40 = vector.broadcast %39 : f32 to vector<1x128xf32>
    %41 = arith.addf %38, %40 : vector<1x128xf32>
    %cst_8 = arith.constant 0.000000e+00 : f32
    %42 = vector.broadcast %cst_8 : f32 to vector<1x128xf32>
    %43 = arith.maximumf %41, %42 : vector<1x128xf32>
    %c8 = arith.constant 8 : index
    %44 = memref.load %arg1[%c8] : memref<78xf32, #tpu.memory_space<smem>>
    %45 = vector.broadcast %44 : f32 to vector<1x128xf32>
    %46 = arith.mulf %0, %45 : vector<1x128xf32>
    %c9 = arith.constant 9 : index
    %47 = memref.load %arg1[%c9] : memref<78xf32, #tpu.memory_space<smem>>
    %48 = vector.broadcast %47 : f32 to vector<1x128xf32>
    %49 = arith.mulf %1, %48 : vector<1x128xf32>
    %50 = arith.addf %46, %49 : vector<1x128xf32>
    %c10 = arith.constant 10 : index
    %51 = memref.load %arg1[%c10] : memref<78xf32, #tpu.memory_space<smem>>
    %52 = vector.broadcast %51 : f32 to vector<1x128xf32>
    %53 = arith.mulf %2, %52 : vector<1x128xf32>
    %54 = arith.addf %50, %53 : vector<1x128xf32>
    %c11 = arith.constant 11 : index
    %55 = memref.load %arg1[%c11] : memref<78xf32, #tpu.memory_space<smem>>
    %56 = vector.broadcast %55 : f32 to vector<1x128xf32>
    %57 = arith.mulf %3, %56 : vector<1x128xf32>
    %58 = arith.addf %54, %57 : vector<1x128xf32>
    %c18 = arith.constant 18 : index
    %59 = memref.load %arg1[%c18] : memref<78xf32, #tpu.memory_space<smem>>
    %60 = vector.broadcast %59 : f32 to vector<1x128xf32>
    %61 = arith.addf %58, %60 : vector<1x128xf32>
    %cst_9 = arith.constant 0.000000e+00 : f32
    %62 = vector.broadcast %cst_9 : f32 to vector<1x128xf32>
    %63 = arith.maximumf %61, %62 : vector<1x128xf32>
    %c12 = arith.constant 12 : index
    %64 = memref.load %arg1[%c12] : memref<78xf32, #tpu.memory_space<smem>>
    %65 = vector.broadcast %64 : f32 to vector<1x128xf32>
    %66 = arith.mulf %0, %65 : vector<1x128xf32>
    %c13 = arith.constant 13 : index
    %67 = memref.load %arg1[%c13] : memref<78xf32, #tpu.memory_space<smem>>
    %68 = vector.broadcast %67 : f32 to vector<1x128xf32>
    %69 = arith.mulf %1, %68 : vector<1x128xf32>
    %70 = arith.addf %66, %69 : vector<1x128xf32>
    %c14 = arith.constant 14 : index
    %71 = memref.load %arg1[%c14] : memref<78xf32, #tpu.memory_space<smem>>
    %72 = vector.broadcast %71 : f32 to vector<1x128xf32>
    %73 = arith.mulf %2, %72 : vector<1x128xf32>
    %74 = arith.addf %70, %73 : vector<1x128xf32>
    %c15 = arith.constant 15 : index
    %75 = memref.load %arg1[%c15] : memref<78xf32, #tpu.memory_space<smem>>
    %76 = vector.broadcast %75 : f32 to vector<1x128xf32>
    %77 = arith.mulf %3, %76 : vector<1x128xf32>
    %78 = arith.addf %74, %77 : vector<1x128xf32>
    %c19 = arith.constant 19 : index
    %79 = memref.load %arg1[%c19] : memref<78xf32, #tpu.memory_space<smem>>
    %80 = vector.broadcast %79 : f32 to vector<1x128xf32>
    %81 = arith.addf %78, %80 : vector<1x128xf32>
    %cst_10 = arith.constant 0.000000e+00 : f32
    %82 = vector.broadcast %cst_10 : f32 to vector<1x128xf32>
    %83 = arith.maximumf %81, %82 : vector<1x128xf32>
    %c20 = arith.constant 20 : index
    %84 = memref.load %arg1[%c20] : memref<78xf32, #tpu.memory_space<smem>>
    %85 = vector.broadcast %84 : f32 to vector<1x128xf32>
    %86 = arith.mulf %23, %85 : vector<1x128xf32>
    %c21 = arith.constant 21 : index
    %87 = memref.load %arg1[%c21] : memref<78xf32, #tpu.memory_space<smem>>
    %88 = vector.broadcast %87 : f32 to vector<1x128xf32>
    %89 = arith.mulf %43, %88 : vector<1x128xf32>
    %90 = arith.addf %86, %89 : vector<1x128xf32>
    %c22 = arith.constant 22 : index
    %91 = memref.load %arg1[%c22] : memref<78xf32, #tpu.memory_space<smem>>
    %92 = vector.broadcast %91 : f32 to vector<1x128xf32>
    %93 = arith.mulf %63, %92 : vector<1x128xf32>
    %94 = arith.addf %90, %93 : vector<1x128xf32>
    %c23 = arith.constant 23 : index
    %95 = memref.load %arg1[%c23] : memref<78xf32, #tpu.memory_space<smem>>
    %96 = vector.broadcast %95 : f32 to vector<1x128xf32>
    %97 = arith.mulf %83, %96 : vector<1x128xf32>
    %98 = arith.addf %94, %97 : vector<1x128xf32>
    %c52 = arith.constant 52 : index
    %99 = memref.load %arg1[%c52] : memref<78xf32, #tpu.memory_space<smem>>
    %100 = vector.broadcast %99 : f32 to vector<1x128xf32>
    %101 = arith.addf %98, %100 : vector<1x128xf32>
    %cst_11 = arith.constant 0.000000e+00 : f32
    %102 = vector.broadcast %cst_11 : f32 to vector<1x128xf32>
    %103 = arith.maximumf %101, %102 : vector<1x128xf32>
    %c24 = arith.constant 24 : index
    %104 = memref.load %arg1[%c24] : memref<78xf32, #tpu.memory_space<smem>>
    %105 = vector.broadcast %104 : f32 to vector<1x128xf32>
    %106 = arith.mulf %23, %105 : vector<1x128xf32>
    %c25 = arith.constant 25 : index
    %107 = memref.load %arg1[%c25] : memref<78xf32, #tpu.memory_space<smem>>
    %108 = vector.broadcast %107 : f32 to vector<1x128xf32>
    %109 = arith.mulf %43, %108 : vector<1x128xf32>
    %110 = arith.addf %106, %109 : vector<1x128xf32>
    %c26 = arith.constant 26 : index
    %111 = memref.load %arg1[%c26] : memref<78xf32, #tpu.memory_space<smem>>
    %112 = vector.broadcast %111 : f32 to vector<1x128xf32>
    %113 = arith.mulf %63, %112 : vector<1x128xf32>
    %114 = arith.addf %110, %113 : vector<1x128xf32>
    %c27 = arith.constant 27 : index
    %115 = memref.load %arg1[%c27] : memref<78xf32, #tpu.memory_space<smem>>
    %116 = vector.broadcast %115 : f32 to vector<1x128xf32>
    %117 = arith.mulf %83, %116 : vector<1x128xf32>
    %118 = arith.addf %114, %117 : vector<1x128xf32>
    %c53 = arith.constant 53 : index
    %119 = memref.load %arg1[%c53] : memref<78xf32, #tpu.memory_space<smem>>
    %120 = vector.broadcast %119 : f32 to vector<1x128xf32>
    %121 = arith.addf %118, %120 : vector<1x128xf32>
    %cst_12 = arith.constant 0.000000e+00 : f32
    %122 = vector.broadcast %cst_12 : f32 to vector<1x128xf32>
    %123 = arith.maximumf %121, %122 : vector<1x128xf32>
    %c28 = arith.constant 28 : index
    %124 = memref.load %arg1[%c28] : memref<78xf32, #tpu.memory_space<smem>>
    %125 = vector.broadcast %124 : f32 to vector<1x128xf32>
    %126 = arith.mulf %23, %125 : vector<1x128xf32>
    %c29 = arith.constant 29 : index
    %127 = memref.load %arg1[%c29] : memref<78xf32, #tpu.memory_space<smem>>
    %128 = vector.broadcast %127 : f32 to vector<1x128xf32>
    %129 = arith.mulf %43, %128 : vector<1x128xf32>
    %130 = arith.addf %126, %129 : vector<1x128xf32>
    %c30 = arith.constant 30 : index
    %131 = memref.load %arg1[%c30] : memref<78xf32, #tpu.memory_space<smem>>
    %132 = vector.broadcast %131 : f32 to vector<1x128xf32>
    %133 = arith.mulf %63, %132 : vector<1x128xf32>
    %134 = arith.addf %130, %133 : vector<1x128xf32>
    %c31 = arith.constant 31 : index
    %135 = memref.load %arg1[%c31] : memref<78xf32, #tpu.memory_space<smem>>
    %136 = vector.broadcast %135 : f32 to vector<1x128xf32>
    %137 = arith.mulf %83, %136 : vector<1x128xf32>
    %138 = arith.addf %134, %137 : vector<1x128xf32>
    %c54 = arith.constant 54 : index
    %139 = memref.load %arg1[%c54] : memref<78xf32, #tpu.memory_space<smem>>
    %140 = vector.broadcast %139 : f32 to vector<1x128xf32>
    %141 = arith.addf %138, %140 : vector<1x128xf32>
    %cst_13 = arith.constant 0.000000e+00 : f32
    %142 = vector.broadcast %cst_13 : f32 to vector<1x128xf32>
    %143 = arith.maximumf %141, %142 : vector<1x128xf32>
    %c32 = arith.constant 32 : index
    %144 = memref.load %arg1[%c32] : memref<78xf32, #tpu.memory_space<smem>>
    %145 = vector.broadcast %144 : f32 to vector<1x128xf32>
    %146 = arith.mulf %23, %145 : vector<1x128xf32>
    %c33 = arith.constant 33 : index
    %147 = memref.load %arg1[%c33] : memref<78xf32, #tpu.memory_space<smem>>
    %148 = vector.broadcast %147 : f32 to vector<1x128xf32>
    %149 = arith.mulf %43, %148 : vector<1x128xf32>
    %150 = arith.addf %146, %149 : vector<1x128xf32>
    %c34 = arith.constant 34 : index
    %151 = memref.load %arg1[%c34] : memref<78xf32, #tpu.memory_space<smem>>
    %152 = vector.broadcast %151 : f32 to vector<1x128xf32>
    %153 = arith.mulf %63, %152 : vector<1x128xf32>
    %154 = arith.addf %150, %153 : vector<1x128xf32>
    %c35 = arith.constant 35 : index
    %155 = memref.load %arg1[%c35] : memref<78xf32, #tpu.memory_space<smem>>
    %156 = vector.broadcast %155 : f32 to vector<1x128xf32>
    %157 = arith.mulf %83, %156 : vector<1x128xf32>
    %158 = arith.addf %154, %157 : vector<1x128xf32>
    %c55 = arith.constant 55 : index
    %159 = memref.load %arg1[%c55] : memref<78xf32, #tpu.memory_space<smem>>
    %160 = vector.broadcast %159 : f32 to vector<1x128xf32>
    %161 = arith.addf %158, %160 : vector<1x128xf32>
    %cst_14 = arith.constant 0.000000e+00 : f32
    %162 = vector.broadcast %cst_14 : f32 to vector<1x128xf32>
    %163 = arith.maximumf %161, %162 : vector<1x128xf32>
    %c36 = arith.constant 36 : index
    %164 = memref.load %arg1[%c36] : memref<78xf32, #tpu.memory_space<smem>>
    %165 = vector.broadcast %164 : f32 to vector<1x128xf32>
    %166 = arith.mulf %23, %165 : vector<1x128xf32>
    %c37 = arith.constant 37 : index
    %167 = memref.load %arg1[%c37] : memref<78xf32, #tpu.memory_space<smem>>
    %168 = vector.broadcast %167 : f32 to vector<1x128xf32>
    %169 = arith.mulf %43, %168 : vector<1x128xf32>
    %170 = arith.addf %166, %169 : vector<1x128xf32>
    %c38 = arith.constant 38 : index
    %171 = memref.load %arg1[%c38] : memref<78xf32, #tpu.memory_space<smem>>
    %172 = vector.broadcast %171 : f32 to vector<1x128xf32>
    %173 = arith.mulf %63, %172 : vector<1x128xf32>
    %174 = arith.addf %170, %173 : vector<1x128xf32>
    %c39 = arith.constant 39 : index
    %175 = memref.load %arg1[%c39] : memref<78xf32, #tpu.memory_space<smem>>
    %176 = vector.broadcast %175 : f32 to vector<1x128xf32>
    %177 = arith.mulf %83, %176 : vector<1x128xf32>
    %178 = arith.addf %174, %177 : vector<1x128xf32>
    %c56 = arith.constant 56 : index
    %179 = memref.load %arg1[%c56] : memref<78xf32, #tpu.memory_space<smem>>
    %180 = vector.broadcast %179 : f32 to vector<1x128xf32>
    %181 = arith.addf %178, %180 : vector<1x128xf32>
    %cst_15 = arith.constant 0.000000e+00 : f32
    %182 = vector.broadcast %cst_15 : f32 to vector<1x128xf32>
    %183 = arith.maximumf %181, %182 : vector<1x128xf32>
    %c40 = arith.constant 40 : index
    %184 = memref.load %arg1[%c40] : memref<78xf32, #tpu.memory_space<smem>>
    %185 = vector.broadcast %184 : f32 to vector<1x128xf32>
    %186 = arith.mulf %23, %185 : vector<1x128xf32>
    %c41 = arith.constant 41 : index
    %187 = memref.load %arg1[%c41] : memref<78xf32, #tpu.memory_space<smem>>
    %188 = vector.broadcast %187 : f32 to vector<1x128xf32>
    %189 = arith.mulf %43, %188 : vector<1x128xf32>
    %190 = arith.addf %186, %189 : vector<1x128xf32>
    %c42 = arith.constant 42 : index
    %191 = memref.load %arg1[%c42] : memref<78xf32, #tpu.memory_space<smem>>
    %192 = vector.broadcast %191 : f32 to vector<1x128xf32>
    %193 = arith.mulf %63, %192 : vector<1x128xf32>
    %194 = arith.addf %190, %193 : vector<1x128xf32>
    %c43 = arith.constant 43 : index
    %195 = memref.load %arg1[%c43] : memref<78xf32, #tpu.memory_space<smem>>
    %196 = vector.broadcast %195 : f32 to vector<1x128xf32>
    %197 = arith.mulf %83, %196 : vector<1x128xf32>
    %198 = arith.addf %194, %197 : vector<1x128xf32>
    %c57 = arith.constant 57 : index
    %199 = memref.load %arg1[%c57] : memref<78xf32, #tpu.memory_space<smem>>
    %200 = vector.broadcast %199 : f32 to vector<1x128xf32>
    %201 = arith.addf %198, %200 : vector<1x128xf32>
    %cst_16 = arith.constant 0.000000e+00 : f32
    %202 = vector.broadcast %cst_16 : f32 to vector<1x128xf32>
    %203 = arith.maximumf %201, %202 : vector<1x128xf32>
    %c44 = arith.constant 44 : index
    %204 = memref.load %arg1[%c44] : memref<78xf32, #tpu.memory_space<smem>>
    %205 = vector.broadcast %204 : f32 to vector<1x128xf32>
    %206 = arith.mulf %23, %205 : vector<1x128xf32>
    %c45 = arith.constant 45 : index
    %207 = memref.load %arg1[%c45] : memref<78xf32, #tpu.memory_space<smem>>
    %208 = vector.broadcast %207 : f32 to vector<1x128xf32>
    %209 = arith.mulf %43, %208 : vector<1x128xf32>
    %210 = arith.addf %206, %209 : vector<1x128xf32>
    %c46 = arith.constant 46 : index
    %211 = memref.load %arg1[%c46] : memref<78xf32, #tpu.memory_space<smem>>
    %212 = vector.broadcast %211 : f32 to vector<1x128xf32>
    %213 = arith.mulf %63, %212 : vector<1x128xf32>
    %214 = arith.addf %210, %213 : vector<1x128xf32>
    %c47 = arith.constant 47 : index
    %215 = memref.load %arg1[%c47] : memref<78xf32, #tpu.memory_space<smem>>
    %216 = vector.broadcast %215 : f32 to vector<1x128xf32>
    %217 = arith.mulf %83, %216 : vector<1x128xf32>
    %218 = arith.addf %214, %217 : vector<1x128xf32>
    %c58 = arith.constant 58 : index
    %219 = memref.load %arg1[%c58] : memref<78xf32, #tpu.memory_space<smem>>
    %220 = vector.broadcast %219 : f32 to vector<1x128xf32>
    %221 = arith.addf %218, %220 : vector<1x128xf32>
    %cst_17 = arith.constant 0.000000e+00 : f32
    %222 = vector.broadcast %cst_17 : f32 to vector<1x128xf32>
    %223 = arith.maximumf %221, %222 : vector<1x128xf32>
    %c48 = arith.constant 48 : index
    %224 = memref.load %arg1[%c48] : memref<78xf32, #tpu.memory_space<smem>>
    %225 = vector.broadcast %224 : f32 to vector<1x128xf32>
    %226 = arith.mulf %23, %225 : vector<1x128xf32>
    %c49 = arith.constant 49 : index
    %227 = memref.load %arg1[%c49] : memref<78xf32, #tpu.memory_space<smem>>
    %228 = vector.broadcast %227 : f32 to vector<1x128xf32>
    %229 = arith.mulf %43, %228 : vector<1x128xf32>
    %230 = arith.addf %226, %229 : vector<1x128xf32>
    %c50 = arith.constant 50 : index
    %231 = memref.load %arg1[%c50] : memref<78xf32, #tpu.memory_space<smem>>
    %232 = vector.broadcast %231 : f32 to vector<1x128xf32>
    %233 = arith.mulf %63, %232 : vector<1x128xf32>
    %234 = arith.addf %230, %233 : vector<1x128xf32>
    %c51 = arith.constant 51 : index
    %235 = memref.load %arg1[%c51] : memref<78xf32, #tpu.memory_space<smem>>
    %236 = vector.broadcast %235 : f32 to vector<1x128xf32>
    %237 = arith.mulf %83, %236 : vector<1x128xf32>
    %238 = arith.addf %234, %237 : vector<1x128xf32>
    %c59 = arith.constant 59 : index
    %239 = memref.load %arg1[%c59] : memref<78xf32, #tpu.memory_space<smem>>
    %240 = vector.broadcast %239 : f32 to vector<1x128xf32>
    %241 = arith.addf %238, %240 : vector<1x128xf32>
    %cst_18 = arith.constant 0.000000e+00 : f32
    %242 = vector.broadcast %cst_18 : f32 to vector<1x128xf32>
    %243 = arith.maximumf %241, %242 : vector<1x128xf32>
    %c60 = arith.constant 60 : index
    %244 = memref.load %arg1[%c60] : memref<78xf32, #tpu.memory_space<smem>>
    %245 = vector.broadcast %244 : f32 to vector<1x128xf32>
    %246 = arith.mulf %103, %245 : vector<1x128xf32>
    %c61 = arith.constant 61 : index
    %247 = memref.load %arg1[%c61] : memref<78xf32, #tpu.memory_space<smem>>
    %248 = vector.broadcast %247 : f32 to vector<1x128xf32>
    %249 = arith.mulf %123, %248 : vector<1x128xf32>
    %250 = arith.addf %246, %249 : vector<1x128xf32>
    %c62 = arith.constant 62 : index
    %251 = memref.load %arg1[%c62] : memref<78xf32, #tpu.memory_space<smem>>
    %252 = vector.broadcast %251 : f32 to vector<1x128xf32>
    %253 = arith.mulf %143, %252 : vector<1x128xf32>
    %254 = arith.addf %250, %253 : vector<1x128xf32>
    %c63 = arith.constant 63 : index
    %255 = memref.load %arg1[%c63] : memref<78xf32, #tpu.memory_space<smem>>
    %256 = vector.broadcast %255 : f32 to vector<1x128xf32>
    %257 = arith.mulf %163, %256 : vector<1x128xf32>
    %258 = arith.addf %254, %257 : vector<1x128xf32>
    %c64 = arith.constant 64 : index
    %259 = memref.load %arg1[%c64] : memref<78xf32, #tpu.memory_space<smem>>
    %260 = vector.broadcast %259 : f32 to vector<1x128xf32>
    %261 = arith.mulf %183, %260 : vector<1x128xf32>
    %262 = arith.addf %258, %261 : vector<1x128xf32>
    %c65 = arith.constant 65 : index
    %263 = memref.load %arg1[%c65] : memref<78xf32, #tpu.memory_space<smem>>
    %264 = vector.broadcast %263 : f32 to vector<1x128xf32>
    %265 = arith.mulf %203, %264 : vector<1x128xf32>
    %266 = arith.addf %262, %265 : vector<1x128xf32>
    %c66 = arith.constant 66 : index
    %267 = memref.load %arg1[%c66] : memref<78xf32, #tpu.memory_space<smem>>
    %268 = vector.broadcast %267 : f32 to vector<1x128xf32>
    %269 = arith.mulf %223, %268 : vector<1x128xf32>
    %270 = arith.addf %266, %269 : vector<1x128xf32>
    %c67 = arith.constant 67 : index
    %271 = memref.load %arg1[%c67] : memref<78xf32, #tpu.memory_space<smem>>
    %272 = vector.broadcast %271 : f32 to vector<1x128xf32>
    %273 = arith.mulf %243, %272 : vector<1x128xf32>
    %274 = arith.addf %270, %273 : vector<1x128xf32>
    %c76 = arith.constant 76 : index
    %275 = memref.load %arg1[%c76] : memref<78xf32, #tpu.memory_space<smem>>
    %276 = vector.broadcast %275 : f32 to vector<1x128xf32>
    %277 = arith.addf %274, %276 : vector<1x128xf32>
    %c68 = arith.constant 68 : index
    %278 = memref.load %arg1[%c68] : memref<78xf32, #tpu.memory_space<smem>>
    %279 = vector.broadcast %278 : f32 to vector<1x128xf32>
    %280 = arith.mulf %103, %279 : vector<1x128xf32>
    %c69 = arith.constant 69 : index
    %281 = memref.load %arg1[%c69] : memref<78xf32, #tpu.memory_space<smem>>
    %282 = vector.broadcast %281 : f32 to vector<1x128xf32>
    %283 = arith.mulf %123, %282 : vector<1x128xf32>
    %284 = arith.addf %280, %283 : vector<1x128xf32>
    %c70 = arith.constant 70 : index
    %285 = memref.load %arg1[%c70] : memref<78xf32, #tpu.memory_space<smem>>
    %286 = vector.broadcast %285 : f32 to vector<1x128xf32>
    %287 = arith.mulf %143, %286 : vector<1x128xf32>
    %288 = arith.addf %284, %287 : vector<1x128xf32>
    %c71 = arith.constant 71 : index
    %289 = memref.load %arg1[%c71] : memref<78xf32, #tpu.memory_space<smem>>
    %290 = vector.broadcast %289 : f32 to vector<1x128xf32>
    %291 = arith.mulf %163, %290 : vector<1x128xf32>
    %292 = arith.addf %288, %291 : vector<1x128xf32>
    %c72 = arith.constant 72 : index
    %293 = memref.load %arg1[%c72] : memref<78xf32, #tpu.memory_space<smem>>
    %294 = vector.broadcast %293 : f32 to vector<1x128xf32>
    %295 = arith.mulf %183, %294 : vector<1x128xf32>
    %296 = arith.addf %292, %295 : vector<1x128xf32>
    %c73 = arith.constant 73 : index
    %297 = memref.load %arg1[%c73] : memref<78xf32, #tpu.memory_space<smem>>
    %298 = vector.broadcast %297 : f32 to vector<1x128xf32>
    %299 = arith.mulf %203, %298 : vector<1x128xf32>
    %300 = arith.addf %296, %299 : vector<1x128xf32>
    %c74 = arith.constant 74 : index
    %301 = memref.load %arg1[%c74] : memref<78xf32, #tpu.memory_space<smem>>
    %302 = vector.broadcast %301 : f32 to vector<1x128xf32>
    %303 = arith.mulf %223, %302 : vector<1x128xf32>
    %304 = arith.addf %300, %303 : vector<1x128xf32>
    %c75 = arith.constant 75 : index
    %305 = memref.load %arg1[%c75] : memref<78xf32, #tpu.memory_space<smem>>
    %306 = vector.broadcast %305 : f32 to vector<1x128xf32>
    %307 = arith.mulf %243, %306 : vector<1x128xf32>
    %308 = arith.addf %304, %307 : vector<1x128xf32>
    %c77 = arith.constant 77 : index
    %309 = memref.load %arg1[%c77] : memref<78xf32, #tpu.memory_space<smem>>
    %310 = vector.broadcast %309 : f32 to vector<1x128xf32>
    %311 = arith.addf %308, %310 : vector<1x128xf32>
    %312 = tpu.concatenate %277, %311 in 0 : vector<1x128xf32>, vector<1x128xf32> -> vector<2x128xf32>
    %c0_19 = arith.constant 0 : index
    %c0_20 = arith.constant 0 : index
    %313 = vector.load %arg3[%c0_19, %c0_20] : memref<2x128xf32, #tpu.memory_space<vmem>>, vector<2x128xf32>
    %314 = arith.addf %312, %313 : vector<2x128xf32>
    %315 = math.tanh %314 : vector<2x128xf32>
    %c0_21 = arith.constant 0 : index
    %c0_22 = arith.constant 0 : index
    %316 = vector.load %arg4[%c0_21, %c0_22] : memref<2x128xf32, #tpu.memory_space<vmem>>, vector<2x128xf32>
    tpu.vector_store %arg4[%c0_21, %c0_22], %315 {strides = array<i32>} : memref<2x128xf32, #tpu.memory_space<vmem>>, vector<2x128xf32>,
    return
  }
  func.func @transform_0(%arg0: i32) -> i32 {
    %c0_i32 = arith.constant 0 : i32
    %c0_i32_0 = arith.constant 0 : i32
    return %c0_i32 : i32
  }
  func.func @transform_1(%arg0: i32) -> (i32, i32) {
    %c0_i32 = arith.constant 0 : i32
    %c0_i32_0 = arith.constant 0 : i32
    return %c0_i32, %arg0 : i32, i32
  }
  func.func @transform_2(%arg0: i32) -> (i32, i32) {
    %c0_i32 = arith.constant 0 : i32
    %c0_i32_0 = arith.constant 0 : i32
    return %c0_i32, %arg0 : i32, i32
  }
  func.func @transform_3(%arg0: i32) -> (i32, i32) {
    %c0_i32 = arith.constant 0 : i32
    %c0_i32_0 = arith.constant 0 : i32
    return %c0_i32, %arg0 : i32, i32
  }
}

</mosaic_0001>

<llo_original>
// kernel: tpu_custom_call.1
$region0: #{tpu_custom_call.1}
  #allocation0 [shape = 'u32[]', space=smem, size = 0x4, offset = 0x4, fixed_abs, tag = 'smem constant byte address 0x4 - core index']
  #allocation1 [shape = 'u32[144,128]{1,0:T(1,128)}', space=vmem, size = 0x12000, scoped, tag = 'internal scratch']
  %s0 = inlined_call_operand.hbm [shape: f32[78], index: 0, kind: input, shape index: {}]
  %s1 = inlined_call_operand.hbm [shape: f32[4,256], index: 1, kind: input, shape index: {}]
  %s2 = inlined_call_operand.hbm [shape: f32[2,256], index: 2, kind: input, shape index: {}]
  %s3 = inlined_call_operand.hbm [shape: f32[2,256], index: 3, kind: output, shape index: {}]
  %s4 = sld [smem:[#allocation0]]
  $region57: #{tpu_custom_call.1} parent=0
    _
  %s6 = ssub.s32 1, %s4
  %s7 = scalar_select 0, %s6, %s4
  $region1: #{tpu_custom_call.1} parent=0
    #allocation2 [shape = 'u8[512]{0}', space=smem, size = 0x200, scoped, tag = 'input window, operand 0, single buffered']
    #allocation3 [shape = 's32[2]{0}', space=sflag, size = 0x8, scoped, tag = 'scoped memory for tpu_custom_call.1']
    #allocation4 [shape = 's32[2]{0}', space=sflag, size = 0x8, scoped, tag = 'scoped memory for tpu_custom_call.1']
    #allocation5 [shape = 's32[2]{0}', space=sflag, size = 0x8, scoped, tag = 'scoped memory for tpu_custom_call.1']
    #allocation6 [shape = 'u8[4096]{0}', space=vmem, size = 0x1000, scoped, tag = 'input window, operand 1']
    #allocation7 [shape = 'u8[2048]{0}', space=vmem, size = 0x800, scoped, tag = 'input window, operand 2']
    #allocation8 [shape = 's32[2]{0}', space=sflag, size = 0x8, scoped, tag = 'scoped memory for tpu_custom_call.1']
    #allocation9 [shape = 'u8[2048]{0}', space=vmem, size = 0x800, scoped, tag = 'output window, operand 0']
    %8 = vsyncpa [#allocation5], 0
    %9 = vsyncpa [#allocation3], 0
    %s10 = scalar_lea.sflag [#allocation3], 1
    %11 = vsyncpa %s10, 0
    %12 = vsyncpa [#allocation8], 0
    %s13 = scalar_lea.sflag [#allocation8], 1
    %14 = vsyncpa %s13, 0
    %15 = vsyncpa [#allocation4], 0
    %s16 = scalar_lea.sflag [#allocation4], 1
    %17 = vsyncpa %s16, 0
    loop: start=0, step=1, limit=4
    $region2: #{tpu_custom_call.1} parent=1 // loop_pre_header
      _
    $region3: #{tpu_custom_call.1} parent=1 // loop_header
      %s19 = sphi 0, %s23
      %p20 = scmp.ge.s32.totalorder %s19, 4
      %s27 = sphi 0, %s27
      %s29 = sphi 0, %s27
      %s30 = sphi 0, %s29
      %s44 = sphi 0, %s30
      %s50 = sphi 0, %s52
      %s53 = sphi 0, %s50
      %s54 = sphi 0, %s53
      %s70 = sphi 0, %s54
      %s76 = sphi 0, %s78
      %s79 = sphi 0, %s76
      %s80 = sphi 0, %s79
      %s96 = sphi 0, %s80
      %s102 = sphi 0, %s104
      %s105 = sphi 0, %s102
      %s106 = sphi 0, %s105
      %s122 = sphi 0, %s106
    $region4: #{tpu_custom_call.1} parent=1 // loop_header_branch
      %22 = sbr.rel (%p20) target = $region8
    $region5: #{tpu_custom_call.1} parent=1 // loop_body
      %s24 = ssub.s32 %s19, 1
      %s25 = ssub.s32 %s19, 2
      %s26 = sadd.s32 %s19, 1
      %s28 = sadd.s32 %s27, 1
      %p31 = scmp.eq.s32.totalorder %s19, 1
      %p32 = scmp.ne.s32.totalorder %s27, %s29
      %p33 = scmp.eq.s32.totalorder %s19, 0
      %p34 = por %p32, %p33
      %p35 = scmp.ne.s32.totalorder %s27, %s29
      %p36 = scmp.eq.s32.totalorder %s24, 1
      %p37 = por %p35, %p36
      %p38 = scmp.ne.s32.totalorder %s29, %s30
      %p39 = scmp.eq.s32.totalorder %s24, 0
      %p40 = por %p38, %p39
      %p41 = scmp.ne.s32.totalorder %s29, %s30
      %p42 = scmp.eq.s32.totalorder %s25, 1
      %p43 = por %p41, %p42
      %p45 = scmp.ne.s32.totalorder %s30, %s44
      %p46 = scmp.eq.s32.totalorder %s25, 0
      %p47 = por %p45, %p46
      %s48 = ssub.s32 %s19, %s26
      %p49 = scmp.eq.s32.totalorder %s48, 0
      %s51 = sadd.s32 %s50, 1
      %s52 = scalar_select %p49, %s50, %s51
      %p55 = pneg %p49
      %p56 = scmp.eq.s32.totalorder %s19, 1
      %p57 = por %p55, %p56
      %p58 = scmp.ne.s32.totalorder %s50, %s53
      %p59 = scmp.eq.s32.totalorder %s19, 0
      %p60 = por %p58, %p59
      %p61 = scmp.ne.s32.totalorder %s50, %s53
      %p62 = scmp.eq.s32.totalorder %s24, 1
      %p63 = por %p61, %p62
      %p64 = scmp.ne.s32.totalorder %s53, %s54
      %p65 = scmp.eq.s32.totalorder %s24, 0
      %p66 = por %p64, %p65
      %p67 = scmp.ne.s32.totalorder %s53, %s54
      %p68 = scmp.eq.s32.totalorder %s25, 1
      %p69 = por %p67, %p68
      %p71 = scmp.ne.s32.totalorder %s54, %s70
      %p72 = scmp.eq.s32.totalorder %s25, 0
      %p73 = por %p71, %p72
      %s74 = ssub.s32 %s19, %s26
      %p75 = scmp.eq.s32.totalorder %s74, 0
      %s77 = sadd.s32 %s76, 1
      %s78 = scalar_select %p75, %s76, %s77
      %p81 = pneg %p75
      %p82 = scmp.eq.s32.totalorder %s19, 1
      %p83 = por %p81, %p82
      %p84 = scmp.ne.s32.totalorder %s76, %s79
      %p85 = scmp.eq.s32.totalorder %s19, 0
      %p86 = por %p84, %p85
      %p87 = scmp.ne.s32.totalorder %s76, %s79
      %p88 = scmp.eq.s32.totalorder %s24, 1
      %p89 = por %p87, %p88
      %p90 = scmp.ne.s32.totalorder %s79, %s80
      %p91 = scmp.eq.s32.totalorder %s24, 0
      %p92 = por %p90, %p91
      %p93 = scmp.ne.s32.totalorder %s79, %s80
      %p94 = scmp.eq.s32.totalorder %s25, 1
      %p95 = por %p93, %p94
      %p97 = scmp.ne.s32.totalorder %s80, %s96
      %p98 = scmp.eq.s32.totalorder %s25, 0
      %p99 = por %p97, %p98
      %s100 = ssub.s32 %s19, %s26
      %p101 = scmp.eq.s32.totalorder %s100, 0
      %s103 = sadd.s32 %s102, 1
      %s104 = scalar_select %p101, %s102, %s103
      %p107 = pneg %p101
      %p108 = scmp.eq.s32.totalorder %s19, 1
      %p109 = por %p107, %p108
      %p110 = scmp.ne.s32.totalorder %s102, %s105
      %p111 = scmp.eq.s32.totalorder %s19, 0
      %p112 = por %p110, %p111
      %p113 = scmp.ne.s32.totalorder %s102, %s105
      %p114 = scmp.eq.s32.totalorder %s24, 1
      %p115 = por %p113, %p114
      %p116 = scmp.ne.s32.totalorder %s105, %s106
      %p117 = scmp.eq.s32.totalorder %s24, 0
      %p118 = por %p116, %p117
      %p119 = scmp.ne.s32.totalorder %s105, %s106
      %p120 = scmp.eq.s32.totalorder %s25, 1
      %p121 = por %p119, %p120
      %p123 = scmp.ne.s32.totalorder %s106, %s122
      %p124 = scmp.eq.s32.totalorder %s25, 0
      %p125 = por %p123, %p124
      %p126 = scmp.le.s32.totalorder 1, %s19
      %p127 = scmp.lt.s32.totalorder %s19, 3
      %p128 = pnand %p126, %p127
      %p129 = pneg %p128
      // Predicated region
      $region9: #{tpu_custom_call.1} parent=5 // pred_check
        _
      $region10: #{tpu_custom_call.1} parent=5 // pred_check_branch
        %131 = sbr.rel (%p128) target = $region12
      $region11: #{tpu_custom_call.1} parent=5 // pred_region
        %s132 = ssub.s32 %s19, 1
        // Predicated region
        $region13: #{tpu_custom_call.1} parent=11 // pred_check
          %p133 = pneg %p40
        $region14: #{tpu_custom_call.1} parent=11 // pred_check_branch
          %135 = sbr.rel (%p133) target = $region16
        $region15: #{tpu_custom_call.1} parent=11 // pred_region
          %s137 = ssub.s32 16, 16
          %138 = vsyncadd [#allocation5], %s137
          %141 = dma.hbm_to_smem %s0, 16, [#allocation2], [#allocation5]
        $region16: #{tpu_custom_call.1} parent=11 // pred_fallthru
          _
      $region12: #{tpu_custom_call.1} parent=5 // pred_fallthru
        _
      %p142 = scmp.lt.s32.totalorder %s19, 2
      // Predicated region
      $region17: #{tpu_custom_call.1} parent=5 // pred_check
        %p143 = pneg %p142
      $region18: #{tpu_custom_call.1} parent=5 // pred_check_branch
        %145 = sbr.rel (%p143) target = $region20
      $region19: #{tpu_custom_call.1} parent=5 // pred_region
        // Predicated region
        $region21: #{tpu_custom_call.1} parent=19 // pred_check
          %p146 = pneg %p60
        $region22: #{tpu_custom_call.1} parent=19 // pred_check_branch
          %148 = sbr.rel (%p146) target = $region24
        $region23: #{tpu_custom_call.1} parent=19 // pred_region
          %s149 = sand.u32 %s50, 1
          %s150 = scalar_lea.sflag [#allocation3], %s149
          %s151 = sand.u32 %s50, 1
          %s152 = smul.addr %s151, 4
          %s153 = scalar_lea.vmem [#allocation6], %s152
          %s155 = ssub.s32 64, 64
          %156 = vsyncadd %s150, %s155
          %s157 = smul.addr %s19, 64
          %s158 = scalar_lea.hbm %s1, %s157
          %s160 = sshll.u32 %s153, 4
          %s161 = int_to_ptr.vmem [resolvable:$true] %s160
          %163 = dma.hbm_to_vmem [thread:$0]  %s158, 64, %s161, %s150
        $region24: #{tpu_custom_call.1} parent=19 // pred_fallthru
          _
        // Predicated region
        $region25: #{tpu_custom_call.1} parent=19 // pred_check
          %p164 = pneg %p86
        $region26: #{tpu_custom_call.1} parent=19 // pred_check_branch
          %166 = sbr.rel (%p164) target = $region28
        $region27: #{tpu_custom_call.1} parent=19 // pred_region
          %s167 = sand.u32 %s76, 1
          %s168 = scalar_lea.sflag [#allocation8], %s167
          %s169 = sand.u32 %s76, 1
          %s170 = smul.addr %s169, 2
          %s171 = scalar_lea.vmem [#allocation7], %s170
          %s173 = ssub.s32 32, 32
          %174 = vsyncadd %s168, %s173
          %s175 = smul.addr %s19, 32
          %s176 = scalar_lea.hbm %s2, %s175
          %s178 = sshll.u32 %s171, 4
          %s179 = int_to_ptr.vmem [resolvable:$true] %s178
          %181 = dma.hbm_to_vmem [thread:$0]  %s176, 32, %s179, %s168
        $region28: #{tpu_custom_call.1} parent=19 // pred_fallthru
          _
      $region20: #{tpu_custom_call.1} parent=5 // pred_fallthru
        _
      %p182 = scmp.le.s32.totalorder 1, %s19
      %p183 = scmp.lt.s32.totalorder %s19, 3
      %p184 = pnand %p182, %p183
      %p185 = pneg %p184
      // Predicated region
      $region29: #{tpu_custom_call.1} parent=5 // pred_check
        _
      $region30: #{tpu_custom_call.1} parent=5 // pred_check_branch
        %187 = sbr.rel (%p184) target = $region32
      $region31: #{tpu_custom_call.1} parent=5 // pred_region
        %s188 = ssub.s32 %s19, 1
        // Predicated region
        $region33: #{tpu_custom_call.1} parent=31 // pred_check
          %p189 = pneg %p40
        $region34: #{tpu_custom_call.1} parent=31 // pred_check_branch
          %191 = sbr.rel (%p189) target = $region36
        $region35: #{tpu_custom_call.1} parent=31 // pred_region
          %192 = dma.done [#allocation5], 16
        $region36: #{tpu_custom_call.1} parent=31 // pred_fallthru
          _
        %s193 = sand.u32 %s53, 1
        %s194 = scalar_lea.sflag [#allocation3], %s193
        %s195 = sand.u32 %s53, 1
        %s196 = smul.addr %s195, 4
        %s197 = scalar_lea.vmem [#allocation6], %s196
        // Predicated region
        $region37: #{tpu_custom_call.1} parent=31 // pred_check
          %p198 = pneg %p66
        $region38: #{tpu_custom_call.1} parent=31 // pred_check_branch
          %200 = sbr.rel (%p198) target = $region40
        $region39: #{tpu_custom_call.1} parent=31 // pred_region
          %201 = dma.done %s194, 64
        $region40: #{tpu_custom_call.1} parent=31 // pred_fallthru
          _
        %s202 = sand.u32 %s79, 1
        %s203 = scalar_lea.sflag [#allocation8], %s202
        %s204 = sand.u32 %s79, 1
        %s205 = smul.addr %s204, 2
        %s206 = scalar_lea.vmem [#allocation7], %s205
        // Predicated region
        $region41: #{tpu_custom_call.1} parent=31 // pred_check
          %p207 = pneg %p92
        $region42: #{tpu_custom_call.1} parent=31 // pred_check_branch
          %209 = sbr.rel (%p207) target = $region44
        $region43: #{tpu_custom_call.1} parent=31 // pred_region
          %210 = dma.done %s203, 32
        $region44: #{tpu_custom_call.1} parent=31 // pred_fallthru
          _
        %211 = sfence
        %p212 = pneg %p40
        %p213 = pneg %p37
        %s214 = sand.u32 %s53, 1
        %s215 = scalar_lea.sflag [#allocation3], %s214
        %s216 = sand.u32 %s53, 1
        %s217 = smul.addr %s216, 4
        %s218 = scalar_lea.vmem [#allocation6], %s217
        %p219 = pneg %p66
        %p220 = pneg %p63
        %s221 = sand.u32 %s79, 1
        %s222 = scalar_lea.sflag [#allocation8], %s221
        %s223 = sand.u32 %s79, 1
        %s224 = smul.addr %s223, 2
        %s225 = scalar_lea.vmem [#allocation7], %s224
        %p226 = pneg %p92
        %p227 = pneg %p89
        %p228 = pneg %p118
        %p229 = pneg %p115
        %s230 = sand.u32 %s105, 1
        %s231 = scalar_lea.sflag [#allocation4], %s230
        %s232 = sand.u32 %s105, 1
        %s233 = smul.addr %s232, 2
        %s234 = scalar_lea.vmem [#allocation9], %s233
        %v235 = vld [vmem:[%s197] sm:$0x1]
        %v236 = vld [vmem:[%s197 + $0x1] sm:$0x1]
        %v237 = vld [vmem:[%s197 + $0x2] sm:$0x1]
        %v238 = vld [vmem:[%s197 + $0x3] sm:$0x1]
        %s239 = sld [smem:[#allocation2]]
        %v240 = vstv %s239
        %v241 = vmul.f32 %v235, %v240
        %s242 = sld [smem:[#allocation2 + $0x1]]
        %v243 = vstv %s242
        %v244 = vmul.f32 %v236, %v243
        %v245 = vadd.f32 %v241, %v244
        %s246 = sld [smem:[#allocation2 + $0x2]]
        %v247 = vstv %s246
        %v248 = vmul.f32 %v237, %v247
        %v249 = vadd.f32 %v245, %v248
        %s250 = sld [smem:[#allocation2 + $0x3]]
        %v251 = vstv %s250
        %v252 = vmul.f32 %v238, %v251
        %v253 = vadd.f32 %v249, %v252
        %s254 = sld [smem:[#allocation2 + $0x10]]
        %v255 = vstv %s254
        %v256 = vadd.f32 %v253, %v255
        %v257 = vmax.f32 %v256, 0.0
        %s258 = sld [smem:[#allocation2 + $0x4]]
        %v259 = vstv %s258
        %v260 = vmul.f32 %v235, %v259
        %s261 = sld [smem:[#allocation2 + $0x5]]
        %v262 = vstv %s261
        %v263 = vmul.f32 %v236, %v262
        %v264 = vadd.f32 %v260, %v263
        %s265 = sld [smem:[#allocation2 + $0x6]]
        %v266 = vstv %s265
        %v267 = vmul.f32 %v237, %v266
        %v268 = vadd.f32 %v264, %v267
        %s269 = sld [smem:[#allocation2 + $0x7]]
        %v270 = vstv %s269
        %v271 = vmul.f32 %v238, %v270
        %v272 = vadd.f32 %v268, %v271
        %s273 = sld [smem:[#allocation2 + $0x11]]
        %v274 = vstv %s273
        %v275 = vadd.f32 %v272, %v274
        %v276 = vmax.f32 %v275, 0.0
        %s277 = sld [smem:[#allocation2 + $0x8]]
        %v278 = vstv %s277
        %v279 = vmul.f32 %v235, %v278
        %s280 = sld [smem:[#allocation2 + $0x9]]
        %v281 = vstv %s280
        %v282 = vmul.f32 %v236, %v281
        %v283 = vadd.f32 %v279, %v282
        %s284 = sld [smem:[#allocation2 + $0xa]]
        %v285 = vstv %s284
        %v286 = vmul.f32 %v237, %v285
        %v287 = vadd.f32 %v283, %v286
        %s288 = sld [smem:[#allocation2 + $0xb]]
        %v289 = vstv %s288
        %v290 = vmul.f32 %v238, %v289
        %v291 = vadd.f32 %v287, %v290
        %s292 = sld [smem:[#allocation2 + $0x12]]
        %v293 = vstv %s292
        %v294 = vadd.f32 %v291, %v293
        %v295 = vmax.f32 %v294, 0.0
        %s296 = sld [smem:[#allocation2 + $0xc]]
        %v297 = vstv %s296
        %v298 = vmul.f32 %v235, %v297
        %s299 = sld [smem:[#allocation2 + $0xd]]
        %v300 = vstv %s299
        %v301 = vmul.f32 %v236, %v300
        %v302 = vadd.f32 %v298, %v301
        %s303 = sld [smem:[#allocation2 + $0xe]]
        %v304 = vstv %s303
        %v305 = vmul.f32 %v237, %v304
        %v306 = vadd.f32 %v302, %v305
        %s307 = sld [smem:[#allocation2 + $0xf]]
        %v308 = vstv %s307
        %v309 = vmul.f32 %v238, %v308
        %v310 = vadd.f32 %v306, %v309
        %s311 = sld [smem:[#allocation2 + $0x13]]
        %v312 = vstv %s311
        %v313 = vadd.f32 %v310, %v312
        %v314 = vmax.f32 %v313, 0.0
        %s315 = sld [smem:[#allocation2 + $0x14]]
        %v316 = vstv %s315
        %v317 = vmul.f32 %v257, %v316
        %s318 = sld [smem:[#allocation2 + $0x15]]
        %v319 = vstv %s318
        %v320 = vmul.f32 %v276, %v319
        %v321 = vadd.f32 %v317, %v320
        %s322 = sld [smem:[#allocation2 + $0x16]]
        %v323 = vstv %s322
        %v324 = vmul.f32 %v295, %v323
        %v325 = vadd.f32 %v321, %v324
        %s326 = sld [smem:[#allocation2 + $0x17]]
        %v327 = vstv %s326
        %v328 = vmul.f32 %v314, %v327
        %v329 = vadd.f32 %v325, %v328
        %s330 = sld [smem:[#allocation2 + $0x34]]
        %v331 = vstv %s330
        %v332 = vadd.f32 %v329, %v331
        %v333 = vmax.f32 %v332, 0.0
        %s334 = sld [smem:[#allocation2 + $0x18]]
        %v335 = vstv %s334
        %v336 = vmul.f32 %v257, %v335
        %s337 = sld [smem:[#allocation2 + $0x19]]
        %v338 = vstv %s337
        %v339 = vmul.f32 %v276, %v338
        %v340 = vadd.f32 %v336, %v339
        %s341 = sld [smem:[#allocation2 + $0x1a]]
        %v342 = vstv %s341
        %v343 = vmul.f32 %v295, %v342
        %v344 = vadd.f32 %v340, %v343
        %s345 = sld [smem:[#allocation2 + $0x1b]]
        %v346 = vstv %s345
        %v347 = vmul.f32 %v314, %v346
        %v348 = vadd.f32 %v344, %v347
        %s349 = sld [smem:[#allocation2 + $0x35]]
        %v350 = vstv %s349
        %v351 = vadd.f32 %v348, %v350
        %v352 = vmax.f32 %v351, 0.0
        %s353 = sld [smem:[#allocation2 + $0x1c]]
        %v354 = vstv %s353
        %v355 = vmul.f32 %v257, %v354
        %s356 = sld [smem:[#allocation2 + $0x1d]]
        %v357 = vstv %s356
        %v358 = vmul.f32 %v276, %v357
        %v359 = vadd.f32 %v355, %v358
        %s360 = sld [smem:[#allocation2 + $0x1e]]
        %v361 = vstv %s360
        %v362 = vmul.f32 %v295, %v361
        %v363 = vadd.f32 %v359, %v362
        %s364 = sld [smem:[#allocation2 + $0x1f]]
        %v365 = vstv %s364
        %v366 = vmul.f32 %v314, %v365
        %v367 = vadd.f32 %v363, %v366
        %s368 = sld [smem:[#allocation2 + $0x36]]
        %v369 = vstv %s368
        %v370 = vadd.f32 %v367, %v369
        %v371 = vmax.f32 %v370, 0.0
        %s372 = sld [smem:[#allocation2 + $0x20]]
        %v373 = vstv %s372
        %v374 = vmul.f32 %v257, %v373
        %s375 = sld [smem:[#allocation2 + $0x21]]
        %v376 = vstv %s375
        %v377 = vmul.f32 %v276, %v376
        %v378 = vadd.f32 %v374, %v377
        %s379 = sld [smem:[#allocation2 + $0x22]]
        %v380 = vstv %s379
        %v381 = vmul.f32 %v295, %v380
        %v382 = vadd.f32 %v378, %v381
        %s383 = sld [smem:[#allocation2 + $0x23]]
        %v384 = vstv %s383
        %v385 = vmul.f32 %v314, %v384
        %v386 = vadd.f32 %v382, %v385
        %s387 = sld [smem:[#allocation2 + $0x37]]
        %v388 = vstv %s387
        %v389 = vadd.f32 %v386, %v388
        %v390 = vmax.f32 %v389, 0.0
        %s391 = sld [smem:[#allocation2 + $0x24]]
        %v392 = vstv %s391
        %v393 = vmul.f32 %v257, %v392
        %s394 = sld [smem:[#allocation2 + $0x25]]
        %v395 = vstv %s394
        %v396 = vmul.f32 %v276, %v395
        %v397 = vadd.f32 %v393, %v396
        %s398 = sld [smem:[#allocation2 + $0x26]]
        %v399 = vstv %s398
        %v400 = vmul.f32 %v295, %v399
        %v401 = vadd.f32 %v397, %v400
        %s402 = sld [smem:[#allocation2 + $0x27]]
        %v403 = vstv %s402
        %v404 = vmul.f32 %v314, %v403
        %v405 = vadd.f32 %v401, %v404
        %s406 = sld [smem:[#allocation2 + $0x38]]
        %v407 = vstv %s406
        %v408 = vadd.f32 %v405, %v407
        %v409 = vmax.f32 %v408, 0.0
        %s410 = sld [smem:[#allocation2 + $0x28]]
        %v411 = vstv %s410
        %v412 = vmul.f32 %v257, %v411
        %s413 = sld [smem:[#allocation2 + $0x29]]
        %v414 = vstv %s413
        %v415 = vmul.f32 %v276, %v414
        %v416 = vadd.f32 %v412, %v415
        %s417 = sld [smem:[#allocation2 + $0x2a]]
        %v418 = vstv %s417
        %v419 = vmul.f32 %v295, %v418
        %v420 = vadd.f32 %v416, %v419
        %s421 = sld [smem:[#allocation2 + $0x2b]]
        %v422 = vstv %s421
        %v423 = vmul.f32 %v314, %v422
        %v424 = vadd.f32 %v420, %v423
        %s425 = sld [smem:[#allocation2 + $0x39]]
        %v426 = vstv %s425
        %v427 = vadd.f32 %v424, %v426
        %v428 = vmax.f32 %v427, 0.0
        %s429 = sld [smem:[#allocation2 + $0x2c]]
        %v430 = vstv %s429
        %v431 = vmul.f32 %v257, %v430
        %s432 = sld [smem:[#allocation2 + $0x2d]]
        %v433 = vstv %s432
        %v434 = vmul.f32 %v276, %v433
        %v435 = vadd.f32 %v431, %v434
        %s436 = sld [smem:[#allocation2 + $0x2e]]
        %v437 = vstv %s436
        %v438 = vmul.f32 %v295, %v437
        %v439 = vadd.f32 %v435, %v438
        %s440 = sld [smem:[#allocation2 + $0x2f]]
        %v441 = vstv %s440
        %v442 = vmul.f32 %v314, %v441
        %v443 = vadd.f32 %v439, %v442
        %s444 = sld [smem:[#allocation2 + $0x3a]]
        %v445 = vstv %s444
        %v446 = vadd.f32 %v443, %v445
        %v447 = vmax.f32 %v446, 0.0
        %s448 = sld [smem:[#allocation2 + $0x30]]
        %v449 = vstv %s448
        %v450 = vmul.f32 %v257, %v449
        %s451 = sld [smem:[#allocation2 + $0x31]]
        %v452 = vstv %s451
        %v453 = vmul.f32 %v276, %v452
        %v454 = vadd.f32 %v450, %v453
        %s455 = sld [smem:[#allocation2 + $0x32]]
        %v456 = vstv %s455
        %v457 = vmul.f32 %v295, %v456
        %v458 = vadd.f32 %v454, %v457
        %s459 = sld [smem:[#allocation2 + $0x33]]
        %v460 = vstv %s459
        %v461 = vmul.f32 %v314, %v460
        %v462 = vadd.f32 %v458, %v461
        %s463 = sld [smem:[#allocation2 + $0x3b]]
        %v464 = vstv %s463
        %v465 = vadd.f32 %v462, %v464
        %v466 = vmax.f32 %v465, 0.0
        %s467 = sld [smem:[#allocation2 + $0x3c]]
        %v468 = vstv %s467
        %v469 = vmul.f32 %v333, %v468
        %s470 = sld [smem:[#allocation2 + $0x3d]]
        %v471 = vstv %s470
        %v472 = vmul.f32 %v352, %v471
        %v473 = vadd.f32 %v469, %v472
        %s474 = sld [smem:[#allocation2 + $0x3e]]
        %v475 = vstv %s474
        %v476 = vmul.f32 %v371, %v475
        %v477 = vadd.f32 %v473, %v476
        %s478 = sld [smem:[#allocation2 + $0x3f]]
        %v479 = vstv %s478
        %v480 = vmul.f32 %v390, %v479
        %v481 = vadd.f32 %v477, %v480
        %s482 = sld [smem:[#allocation2 + $0x40]]
        %v483 = vstv %s482
        %v484 = vmul.f32 %v409, %v483
        %v485 = vadd.f32 %v481, %v484
        %s486 = sld [smem:[#allocation2 + $0x41]]
        %v487 = vstv %s486
        %v488 = vmul.f32 %v428, %v487
        %v489 = vadd.f32 %v485, %v488
        %s490 = sld [smem:[#allocation2 + $0x42]]
        %v491 = vstv %s490
        %v492 = vmul.f32 %v447, %v491
        %v493 = vadd.f32 %v489, %v492
        %s494 = sld [smem:[#allocation2 + $0x43]]
        %v495 = vstv %s494
        %v496 = vmul.f32 %v466, %v495
        %v497 = vadd.f32 %v493, %v496
        %s498 = sld [smem:[#allocation2 + $0x4c]]
        %v499 = vstv %s498
        %v500 = vadd.f32 %v497, %v499
        %s501 = sld [smem:[#allocation2 + $0x44]]
        %v502 = vstv %s501
        %v503 = vmul.f32 %v333, %v502
        %s504 = sld [smem:[#allocation2 + $0x45]]
        %v505 = vstv %s504
        %v506 = vmul.f32 %v352, %v505
        %v507 = vadd.f32 %v503, %v506
        %s508 = sld [smem:[#allocation2 + $0x46]]
        %v509 = vstv %s508
        %v510 = vmul.f32 %v371, %v509
        %v511 = vadd.f32 %v507, %v510
        %s512 = sld [smem:[#allocation2 + $0x47]]
        %v513 = vstv %s512
        %v514 = vmul.f32 %v390, %v513
        %v515 = vadd.f32 %v511, %v514
        %s516 = sld [smem:[#allocation2 + $0x48]]
        %v517 = vstv %s516
        %v518 = vmul.f32 %v409, %v517
        %v519 = vadd.f32 %v515, %v518
        %s520 = sld [smem:[#allocation2 + $0x49]]
        %v521 = vstv %s520
        %v522 = vmul.f32 %v428, %v521
        %v523 = vadd.f32 %v519, %v522
        %s524 = sld [smem:[#allocation2 + $0x4a]]
        %v525 = vstv %s524
        %v526 = vmul.f32 %v447, %v525
        %v527 = vadd.f32 %v523, %v526
        %s528 = sld [smem:[#allocation2 + $0x4b]]
        %v529 = vstv %s528
        %v530 = vmul.f32 %v466, %v529
        %v531 = vadd.f32 %v527, %v530
        %s532 = sld [smem:[#allocation2 + $0x4d]]
        %v533 = vstv %s532
        %v534 = vadd.f32 %v531, %v533
        %v536 = vrot.slane %v534, 7
        %vm538 = vcmask 1040384
        %v539 = vsel %vm538, %v500, %v536
        %v540 = vld [vmem:[%s206] sm:$0x3]
        %v541 = vadd.f32 %v539, %v540
        %v542 = vtanh.pop %v541
        %543 = vst [vmem:[%s234] sm:$0x3] %v542
        %s544 = sand.u32 %s105, 1
        %s545 = scalar_lea.sflag [#allocation4], %s544
        %s546 = sand.u32 %s105, 1
        %s547 = smul.addr %s546, 2
        %s548 = scalar_lea.vmem [#allocation9], %s547
        // Predicated region
        $region45: #{tpu_custom_call.1} parent=31 // pred_check
          %p549 = pneg %p115
        $region46: #{tpu_custom_call.1} parent=31 // pred_check_branch
          %551 = sbr.rel (%p549) target = $region48
        $region47: #{tpu_custom_call.1} parent=31 // pred_region
          %s553 = ssub.s32 32, 32
          %554 = vsyncadd %s545, %s553
          %s555 = smul.addr %s24, 32
          %s556 = scalar_lea.hbm %s3, %s555
          %s558 = sshll.u32 %s548, 4
          %s559 = int_to_ptr.vmem [resolvable:$true] %s558
          %561 = dma.vmem_to_hbm [thread:$0]  %s559, 32, %s556, %s545
        $region48: #{tpu_custom_call.1} parent=31 // pred_fallthru
          _
      $region32: #{tpu_custom_call.1} parent=5 // pred_fallthru
        _
      %p562 = scmp.le.s32.totalorder 2, %s19
      // Predicated region
      $region49: #{tpu_custom_call.1} parent=5 // pred_check
        %p563 = pneg %p562
      $region50: #{tpu_custom_call.1} parent=5 // pred_check_branch
        %565 = sbr.rel (%p563) target = $region52
      $region51: #{tpu_custom_call.1} parent=5 // pred_region
        %s566 = ssub.s32 %s19, 2
        // Predicated region
        $region53: #{tpu_custom_call.1} parent=51 // pred_check
          %p567 = pneg %p121
        $region54: #{tpu_custom_call.1} parent=51 // pred_check_branch
          %569 = sbr.rel (%p567) target = $region56
        $region55: #{tpu_custom_call.1} parent=51 // pred_region
          %s570 = sand.u32 %s106, 1
          %s571 = scalar_lea.sflag [#allocation4], %s570
          %s572 = sand.u32 %s106, 1
          %s573 = smul.addr %s572, 2
          %s574 = scalar_lea.vmem [#allocation9], %s573
          %575 = dma.done %s571, 32
        $region56: #{tpu_custom_call.1} parent=51 // pred_fallthru
          _
      $region52: #{tpu_custom_call.1} parent=5 // pred_fallthru
        _
    $region6: #{tpu_custom_call.1} parent=1 // loop_footer
      %s23 = sadd.s32 1, %s19
    $region7: #{tpu_custom_call.1} parent=1 // loop_footer_branch
      %18 = sbr.rel target = $region3
    $region8: #{tpu_custom_call.1} parent=1 // loop_exit
      _
    %576 = vsyncpa [#allocation3], 1
    %s577 = scalar_lea.sflag [#allocation3], 1
    %578 = vsyncpa %s577, 1
    %579 = vsyncpa [#allocation8], 1
    %s580 = scalar_lea.sflag [#allocation8], 1
    %581 = vsyncpa %s580, 1
    %582 = vsyncpa [#allocation4], 1
    %s583 = scalar_lea.sflag [#allocation4], 1
    %584 = vsyncpa %s583, 1
    %585 = vsyncpa [#allocation5], 1
    %s586 = scalar_lea.sflag [#allocation5], 1
    %587 = vsyncpa %s586, 1

</llo_original>
